<compile_context>
chip_gen: v6e
topology: v6e:2x2x1
jax: 0.10.0
libtpu: 0.0.40
codegen_flags: <defaults>
</compile_context>

<pallas_src>
import functools

import numpy as np
import jax
import jax.numpy as jnp
from jax import lax
from jax.experimental import pallas as pl
from jax.experimental.pallas import tpu as pltpu


def _gaussian_1d(window_size, sigma=1.5):
    """Deterministic 1D gaussian, identical to SSIM._gaussian."""
    g = np.array(
        [np.exp(-((x - window_size // 2) ** 2) / float(2 * sigma ** 2))
         for x in range(window_size)],
        dtype=np.float64)
    return (g / g.sum()).astype(np.float32)


def _band_matrices(H, W, Hpp, ws, B):
    """Banded matrices realizing the separable Gaussian conv as matmuls."""
    g = _gaussian_1d(ws)
    pad = ws // 2
    Wp = W + 2 * pad
    # Horizontal pass:  (rows, Wp) @ bw  -> (rows, W);  out[:, c] = sum_j g[j]*x[:, c+j]
    bw = np.zeros((Wp, W), np.float32)
    for c in range(W):
        bw[c:c + ws, c] = g
    # Vertical pass:  bh @ (Hpp, cols) -> (H, cols);  out[r, :] = sum_k g[k]*x[r+k, :]
    bh = np.zeros((H, Hpp), np.float32)
    for r in range(H):
        bh[r, r:r + ws] = g
    # Block-diagonal over the B images stacked along rows inside one block.
    bh_big = np.kron(np.eye(B, dtype=np.float32), bh)   # (B*H, B*Hpp)
    return jnp.asarray(bw), jnp.asarray(bh_big)


def _pick_batch(NC, H, Hpp, Wp, W):
    """Images per grid step: fill VMEM without blowing the scoped budget."""
    bytes_per_img = 4 * (
        2 * 2 * Hpp * Wp      # two image inputs, double-buffered
        + 5 * Hpp * Wp        # stacked conv-input slab
        + 5 * Hpp * W         # horizontal-pass result
        + 8 * H * W)          # mu/sigma/num/den/ratio temporaries
    budget = 12 * 1024 * 1024          # conservative: fits v5e/v7x scoped VMEM
    b = max(1, budget // max(bytes_per_img, 1))
    # Keep the block-diagonal vertical matrix (B*H, B*Hpp) MXU-sized.
    b = min(b, max(1, 256 // H), max(1, 512 // Hpp), NC)
    return int(max(1, b))


def _ssim_kernel(dr_ref, img1_ref, img2_ref, bw_ref, bh_ref, out_ref,
                 *, B, H, W, Hpp):
    """One block of B images per grid step.

    dr_ref   : (1,)            f32 SMEM   data_range
    img?_ref : (B*Hpp, Wp)     f32 VMEM   zero-padded images, row-stacked
    bw_ref   : (Wp, W)         f32 VMEM   horizontal Gaussian band matrix
    bh_ref   : (B*H, B*Hpp)    f32 VMEM   block-diag vertical band matrix
    out_ref  : (1, 1, 128)     f32        partial sum of the SSIM map (splat)
    """
    dr = dr_ref[0]
    dr4 = (dr * dr) * (dr * dr)
    # Folded normalization: identical ratio to (img/dr) with C=(k*dr)^2.
    c1 = jnp.float32(1e-4) * dr4
    c2 = jnp.float32(9e-4) * dr4

    x1 = img1_ref[...]
    x2 = img2_ref[...]

    # One big horizontal-pass matmul over all five conv inputs.
    slab = jnp.concatenate([x1, x2, x1 * x1, x2 * x2, x1 * x2], axis=0)
    hm = jnp.dot(slab, bw_ref[...], preferred_element_type=jnp.float32)

    bh = bh_ref[...]
    R = B * Hpp                         # rows per quantity (multiple of 8)

    def vconv(q):
        return jnp.dot(bh, hm[q * R:(q + 1) * R, :],
                       preferred_element_type=jnp.float32)

    mu1, mu2, e11, e22, e12 = [vconv(q) for q in range(5)]   # each (B*H, W)

    mu1_sq = mu1 * mu1
    mu2_sq = mu2 * mu2
    mu1_mu2 = mu1 * mu2
    sigma1_sq = e11 - mu1_sq
    sigma2_sq = e22 - mu2_sq
    sigma12 = e12 - mu1_mu2

    num = (2.0 * mu1_mu2 + c1) * (2.0 * sigma12 + c2)
    den = (mu1_sq + mu2_sq + c1) * (sigma1_sq + sigma2_sq + c2)
    r = num / den

    # torch.nan_to_num(ssim_map, nan=1.0): nan -> 1, +/-inf -> finfo max/min.
    finfo = jnp.finfo(jnp.float32)
    r = jnp.where(jnp.isnan(r), jnp.float32(1.0),
                  jnp.clip(r, jnp.float32(finfo.min), jnp.float32(finfo.max)))

    out_ref[...] = jnp.full(out_ref.shape, jnp.sum(r), dtype=jnp.float32)


def ssim_pallas(img1, img2, data_range=None, window_size=11, size_average=True):
    if not size_average:
        # TODO(synk): size_average=False (per-batch-element mean) not wired up.
        raise NotImplementedError("size_average=False not implemented")

    if img1.ndim < 4:
        img1 = img1[None]
    if img2.ndim < 4:
        img2 = img2[None]
    img1 = img1.astype(jnp.float32)
    img2 = img2.astype(jnp.float32)

    # nan_to_num only if any NaN present (matches the PyTorch module).
    has_nan = jnp.isnan(img1).any() | jnp.isnan(img2).any()
    img1 = jnp.where(has_nan,
                     jnp.nan_to_num(img1, nan=0.0, posinf=1.0, neginf=-1.0),
                     img1)
    img2 = jnp.where(has_nan,
                     jnp.nan_to_num(img2, nan=0.0, posinf=1.0, neginf=-1.0),
                     img2)

    if data_range is None:
        dr = jnp.maximum(jnp.maximum(img1.max() - img1.min(),
                                     img2.max() - img2.min()),
                         jnp.float32(1e-8))
    else:
        dr = jnp.asarray(data_range, jnp.float32)
    dr = jnp.maximum(dr, jnp.float32(1e-8))

    ws = window_size
    pad = ws // 2
    N, C, H, W = img1.shape
    if H < ws or W < ws:   # replicate-padding branch of the reference
        rep = ((0, 0), (0, 0), (pad, pad), (pad, pad))
        img1 = jnp.pad(img1, rep, mode="edge")
        img2 = jnp.pad(img2, rep, mode="edge")
        N, C, H, W = img1.shape

    Hp, Wp = H + 2 * pad, W + 2 * pad
    Hpp = ((Hp + 7) // 8) * 8            # sublane-aligned padded height
    NC = N * C

    B = _pick_batch(NC, H, Hpp, Wp, W)
    NCpad = ((NC + B - 1) // B) * B
    npad = NCpad - NC
    G = NCpad // B

    # Zero padding of F.conv2d(padding=pad) + sublane alignment + image-count
    # padding (zero images contribute exactly 1.0 per pixel; corrected below).
    zp = ((0, npad), (pad, pad + (Hpp - Hp)), (pad, pad))
    img1f = jnp.pad(img1.reshape(NC, H, W), zp).reshape(NCpad * Hpp, Wp)
    img2f = jnp.pad(img2.reshape(NC, H, W), zp).reshape(NCpad * Hpp, Wp)

    bw, bh_big = _band_matrices(H, W, Hpp, ws, B)

    kernel = functools.partial(_ssim_kernel, B=B, H=H, W=W, Hpp=Hpp)

    partial_sums = pl.pallas_call(
        kernel,
        out_shape=jax.ShapeDtypeStruct((G, 1, 128), jnp.float32),
        grid_spec=pltpu.PrefetchScalarGridSpec(
            num_scalar_prefetch=0,
            grid=(G,),
            in_specs=[
                pl.BlockSpec(memory_space=pltpu.MemorySpace.SMEM),       # dr
                pl.BlockSpec((B * Hpp, Wp), lambda i: (i, 0)),           # img1
                pl.BlockSpec((B * Hpp, Wp), lambda i: (i, 0)),           # img2
                pl.BlockSpec((Wp, W), lambda i: (0, 0)),                 # Bw
                pl.BlockSpec((B * H, B * Hpp), lambda i: (0, 0)),        # Bh_big
            ],
            out_specs=pl.BlockSpec((1, 1, 128), lambda i: (i, 0, 0)),
        ),
        compiler_params=pltpu.CompilerParams(
            dimension_semantics=("parallel",)),
    )(dr.reshape(1), img1f, img2f, bw, bh_big)

    total = jnp.sum(partial_sums[:, 0, 0])
    # Padded all-zero images yield an SSIM map of exactly 1.0 per pixel.
    total = total - jnp.float32(npad * H * W)
    return total / jnp.float32(NC * H * W)


def ssim_ref(img1, img2, data_range=None, window_size=11):
    """Pure-JAX reference mirroring the PyTorch forward exactly."""
    if img1.ndim < 4:
        img1 = img1[None]
    if img2.ndim < 4:
        img2 = img2[None]
    img1 = img1.astype(jnp.float32)
    img2 = img2.astype(jnp.float32)

    has_nan = jnp.isnan(img1).any() | jnp.isnan(img2).any()
    img1 = jnp.where(has_nan,
                     jnp.nan_to_num(img1, nan=0.0, posinf=1.0, neginf=-1.0),
                     img1)
    img2 = jnp.where(has_nan,
                     jnp.nan_to_num(img2, nan=0.0, posinf=1.0, neginf=-1.0),
                     img2)

    if data_range is None:
        dr = jnp.maximum(jnp.maximum(img1.max() - img1.min(),
                                     img2.max() - img2.min()),
                         jnp.float32(1e-8))
    else:
        dr = jnp.asarray(data_range, jnp.float32)
    dr = jnp.maximum(dr, jnp.float32(1e-8))

    ws = window_size
    pad = ws // 2
    N, C, H, W = img1.shape
    if H < ws or W < ws:
        rep = ((0, 0), (0, 0), (pad, pad), (pad, pad))
        img1 = jnp.pad(img1, rep, mode="edge")
        img2 = jnp.pad(img2, rep, mode="edge")
        N, C, H, W = img1.shape

    g = jnp.asarray(_gaussian_1d(ws))
    w2d = jnp.outer(g, g)[None, None]                      # (1,1,ws,ws)
    w = jnp.broadcast_to(w2d, (C, 1, ws, ws))

    img1 = img1 / dr
    img2 = img2 / dr

    def conv(x):
        return lax.conv_general_dilated(
            x, w, (1, 1), [(pad, pad), (pad, pad)],
            dimension_numbers=("NCHW", "OIHW", "NCHW"),
            feature_group_count=C)

    mu1 = conv(img1)
    mu2 = conv(img2)
    mu1_sq, mu2_sq, mu1_mu2 = mu1 ** 2, mu2 ** 2, mu1 * mu2
    sigma1_sq = conv(img1 ** 2) - mu1_sq
    sigma2_sq = conv(img2 ** 2) - mu2_sq
    sigma12 = conv(img1 * img2) - mu1_mu2
    C1 = (0.01 * dr) ** 2
    C2 = (0.03 * dr) ** 2
    ssim_map = ((2 * mu1_mu2 + C1) * (2 * sigma12 + C2) /
                ((mu1_sq + mu2_sq + C1) * (sigma1_sq + sigma2_sq + C2)))
    ssim_map = jnp.nan_to_num(ssim_map, nan=1.0)
    return ssim_map.mean()


if __name__ == "__main__":
    key = jax.random.PRNGKey(0)
    k1, k2 = jax.random.split(key)
    # channel=1: the registered window buffer is (1, 1, 11, 11), so the
    # original module's depthwise conv (groups=channels) only runs for C=1.
    img1 = jax.random.uniform(k1, (2, 1, 16, 16), dtype=jnp.float32)
    img2 = jax.random.uniform(k2, (2, 1, 16, 16), dtype=jnp.float32)

    out = ssim_pallas(img1, img2)
    out = jax.block_until_ready(out)

    ref = ssim_ref(img1, img2)
    assert abs(float(out) - float(ref)) < 1e-4, (float(out), float(ref))
    print("KERNEL_OK")
</pallas_src>

<mosaic_0001>
module attributes {stable_mosaic.version = 11 : i64} {
  func.func @_ssim_kernel(%arg0: i32, %arg1: memref<1xf32, #tpu.memory_space<smem>>, %arg2: memref<64x26xf32, #tpu.memory_space<vmem>>, %arg3: memref<64x26xf32, #tpu.memory_space<vmem>>, %arg4: memref<26x16xf32, #tpu.memory_space<vmem>>, %arg5: memref<32x64xf32, #tpu.memory_space<vmem>>, %arg6: memref<1x1x128xf32, #tpu.memory_space<vmem>>) attributes {dimension_semantics = [#tpu.dimension_semantics<parallel>], iteration_bounds = array<i64: 1>, scalar_prefetch = 0 : i64, scratch_operands = 0 : i64, tpu.core_type = #tpu.core_type<tc>, window_params = [{transform_indices = @transform_0, window_bounds = array<i64: 1>}, {transform_indices = @transform_1, window_bounds = array<i64: 64, 26>}, {transform_indices = @transform_2, window_bounds = array<i64: 64, 26>}, {pipeline_mode = #tpu.pipeline_mode<synchronous>, transform_indices = @transform_3, window_bounds = array<i64: 26, 16>}, {pipeline_mode = #tpu.pipeline_mode<synchronous>, transform_indices = @transform_4, window_bounds = array<i64: 32, 64>}, {transform_indices = @transform_5, window_bounds = array<i64: 1, 1, 128>}]} {
    %c0 = arith.constant 0 : index
    %0 = memref.load %arg1[%c0] : memref<1xf32, #tpu.memory_space<smem>>
    %1 = arith.mulf %0, %0 : f32
    %2 = arith.mulf %0, %0 : f32
    %3 = arith.mulf %1, %2 : f32
    %cst = arith.constant 9.99999974E-5 : f32
    %4 = arith.mulf %cst, %3 : f32
    %cst_0 = arith.constant 8.99999984E-4 : f32
    %5 = arith.mulf %cst_0, %3 : f32
    %c0_1 = arith.constant 0 : index
    %c0_2 = arith.constant 0 : index
    %6 = vector.load %arg2[%c0_1, %c0_2] : memref<64x26xf32, #tpu.memory_space<vmem>>, vector<64x26xf32>
    %c0_3 = arith.constant 0 : index
    %c0_4 = arith.constant 0 : index
    %7 = vector.load %arg3[%c0_3, %c0_4] : memref<64x26xf32, #tpu.memory_space<vmem>>, vector<64x26xf32>
    %8 = arith.mulf %6, %6 : vector<64x26xf32>
    %9 = arith.mulf %7, %7 : vector<64x26xf32>
    %10 = arith.mulf %6, %7 : vector<64x26xf32>
    %11 = tpu.concatenate %6, %7, %8, %9, %10 in 0 : vector<64x26xf32>, vector<64x26xf32>, vector<64x26xf32>, vector<64x26xf32>, vector<64x26xf32> -> vector<320x26xf32>
    %c0_5 = arith.constant 0 : index
    %c0_6 = arith.constant 0 : index
    %12 = vector.load %arg4[%c0_5, %c0_6] : memref<26x16xf32, #tpu.memory_space<vmem>>, vector<26x16xf32>
    %cst_7 = arith.constant dense<0.000000e+00> : vector<320x16xf32>
    %13 = tpu.matmul %11, %12, %cst_7 {dimension_numbers = #tpu.dot_dimension_numbers<[1], [0], [0], [1], [0, 0, 1, 1], [], []>} : vector<320x26xf32>, vector<26x16xf32>, vector<320x16xf32> -> vector<320x16xf32>
    %c0_8 = arith.constant 0 : index
    %c0_9 = arith.constant 0 : index
    %14 = vector.load %arg5[%c0_8, %c0_9] : memref<32x64xf32, #tpu.memory_space<vmem>>, vector<32x64xf32>
    %15 = vector.extract_strided_slice %13 {offsets = [0, 0], sizes = [64, 16], strides = [1, 1]} : vector<320x16xf32> to vector<64x16xf32>
    %cst_10 = arith.constant dense<0.000000e+00> : vector<32x16xf32>
    %16 = tpu.matmul %14, %15, %cst_10 {dimension_numbers = #tpu.dot_dimension_numbers<[1], [0], [0], [1], [0, 0, 1, 1], [], []>} : vector<32x64xf32>, vector<64x16xf32>, vector<32x16xf32> -> vector<32x16xf32>
    %17 = vector.extract_strided_slice %13 {offsets = [64, 0], sizes = [64, 16], strides = [1, 1]} : vector<320x16xf32> to vector<64x16xf32>
    %cst_11 = arith.constant dense<0.000000e+00> : vector<32x16xf32>
    %18 = tpu.matmul %14, %17, %cst_11 {dimension_numbers = #tpu.dot_dimension_numbers<[1], [0], [0], [1], [0, 0, 1, 1], [], []>} : vector<32x64xf32>, vector<64x16xf32>, vector<32x16xf32> -> vector<32x16xf32>
    %19 = vector.extract_strided_slice %13 {offsets = [128, 0], sizes = [64, 16], strides = [1, 1]} : vector<320x16xf32> to vector<64x16xf32>
    %cst_12 = arith.constant dense<0.000000e+00> : vector<32x16xf32>
    %20 = tpu.matmul %14, %19, %cst_12 {dimension_numbers = #tpu.dot_dimension_numbers<[1], [0], [0], [1], [0, 0, 1, 1], [], []>} : vector<32x64xf32>, vector<64x16xf32>, vector<32x16xf32> -> vector<32x16xf32>
    %21 = vector.extract_strided_slice %13 {offsets = [192, 0], sizes = [64, 16], strides = [1, 1]} : vector<320x16xf32> to vector<64x16xf32>
    %cst_13 = arith.constant dense<0.000000e+00> : vector<32x16xf32>
    %22 = tpu.matmul %14, %21, %cst_13 {dimension_numbers = #tpu.dot_dimension_numbers<[1], [0], [0], [1], [0, 0, 1, 1], [], []>} : vector<32x64xf32>, vector<64x16xf32>, vector<32x16xf32> -> vector<32x16xf32>
    %23 = vector.extract_strided_slice %13 {offsets = [256, 0], sizes = [64, 16], strides = [1, 1]} : vector<320x16xf32> to vector<64x16xf32>
    %cst_14 = arith.constant dense<0.000000e+00> : vector<32x16xf32>
    %24 = tpu.matmul %14, %23, %cst_14 {dimension_numbers = #tpu.dot_dimension_numbers<[1], [0], [0], [1], [0, 0, 1, 1], [], []>} : vector<32x64xf32>, vector<64x16xf32>, vector<32x16xf32> -> vector<32x16xf32>
    %25 = arith.mulf %16, %16 : vector<32x16xf32>
    %26 = arith.mulf %18, %18 : vector<32x16xf32>
    %27 = arith.mulf %16, %18 : vector<32x16xf32>
    %28 = arith.subf %20, %25 : vector<32x16xf32>
    %29 = arith.subf %22, %26 : vector<32x16xf32>
    %30 = arith.subf %24, %27 : vector<32x16xf32>
    %cst_15 = arith.constant 2.000000e+00 : f32
    %31 = vector.broadcast %cst_15 : f32 to vector<32x16xf32>
    %32 = arith.mulf %31, %27 : vector<32x16xf32>
    %33 = vector.broadcast %4 : f32 to vector<32x16xf32>
    %34 = arith.addf %32, %33 : vector<32x16xf32>
    %cst_16 = arith.constant 2.000000e+00 : f32
    %35 = vector.broadcast %cst_16 : f32 to vector<32x16xf32>
    %36 = arith.mulf %35, %30 : vector<32x16xf32>
    %37 = vector.broadcast %5 : f32 to vector<32x16xf32>
    %38 = arith.addf %36, %37 : vector<32x16xf32>
    %39 = arith.mulf %34, %38 : vector<32x16xf32>
    %40 = arith.addf %25, %26 : vector<32x16xf32>
    %41 = vector.broadcast %4 : f32 to vector<32x16xf32>
    %42 = arith.addf %40, %41 : vector<32x16xf32>
    %43 = arith.addf %28, %29 : vector<32x16xf32>
    %44 = vector.broadcast %5 : f32 to vector<32x16xf32>
    %45 = arith.addf %43, %44 : vector<32x16xf32>
    %46 = arith.mulf %42, %45 : vector<32x16xf32>
    %47 = arith.divf %39, %46 : vector<32x16xf32>
    %48 = arith.cmpf one, %47, %47 : vector<32x16xf32>
    %cst_17 = arith.constant -3.40282347E+38 : f32
    %cst_18 = arith.constant 3.40282347E+38 : f32
    %49 = vector.broadcast %cst_17 : f32 to vector<32x16xf32>
    %50 = arith.maximumf %49, %47 : vector<32x16xf32>
    %51 = vector.broadcast %cst_18 : f32 to vector<32x16xf32>
    %52 = arith.minimumf %51, %50 : vector<32x16xf32>
    %cst_19 = arith.constant 1.000000e+00 : f32
    %53 = vector.broadcast %cst_19 : f32 to vector<32x16xf32>
    %54 = arith.select %48, %53, %52 : vector<32x16xi1>, vector<32x16xf32>
    %55 = vector.shape_cast %54 : vector<32x16xf32> to vector<1x32x16xf32>
    %cst_20 = arith.constant dense<0.000000e+00> : vector<1xf32>
    %56 = vector.multi_reduction <add>, %55, %cst_20 [1, 2] : vector<1x32x16xf32> to vector<1xf32>
    %57 = vector.shape_cast %56 : vector<1xf32> to vector<1x1x1xf32>
    %58 = vector.extract %57[0, 0, 0] : f32 from vector<1x1x1xf32>
    %59 = vector.broadcast %58 : f32 to vector<1x1x128xf32>
    %c0_21 = arith.constant 0 : index
    %c0_22 = arith.constant 0 : index
    %c0_23 = arith.constant 0 : index
    %60 = vector.load %arg6[%c0_21, %c0_22, %c0_23] : memref<1x1x128xf32, #tpu.memory_space<vmem>>, vector<1x1x128xf32>
    tpu.vector_store %arg6[%c0_21, %c0_22, %c0_23], %59 {strides = array<i32>} : memref<1x1x128xf32, #tpu.memory_space<vmem>>, vector<1x1x128xf32>,
    return
  }
  func.func @transform_0(%arg0: i32) -> i32 {
    %c0_i32 = arith.constant 0 : i32
    %c0_i32_0 = arith.constant 0 : i32
    return %c0_i32 : i32
  }
  func.func @transform_1(%arg0: i32) -> (i32, i32) {
    %c0_i32 = arith.constant 0 : i32
    %c0_i32_0 = arith.constant 0 : i32
    return %arg0, %c0_i32 : i32, i32
  }
  func.func @transform_2(%arg0: i32) -> (i32, i32) {
    %c0_i32 = arith.constant 0 : i32
    %c0_i32_0 = arith.constant 0 : i32
    return %arg0, %c0_i32 : i32, i32
  }
  func.func @transform_3(%arg0: i32) -> (i32, i32) {
    %c0_i32 = arith.constant 0 : i32
    %c0_i32_0 = arith.constant 0 : i32
    %c0_i32_1 = arith.constant 0 : i32
    return %c0_i32, %c0_i32_0 : i32, i32
  }
  func.func @transform_4(%arg0: i32) -> (i32, i32) {
    %c0_i32 = arith.constant 0 : i32
    %c0_i32_0 = arith.constant 0 : i32
    %c0_i32_1 = arith.constant 0 : i32
    return %c0_i32, %c0_i32_0 : i32, i32
  }
  func.func @transform_5(%arg0: i32) -> (i32, i32, i32) {
    %c0_i32 = arith.constant 0 : i32
    %c0_i32_0 = arith.constant 0 : i32
    %c0_i32_1 = arith.constant 0 : i32
    return %arg0, %c0_i32, %c0_i32_0 : i32, i32, i32
  }
}

</mosaic_0001>

<llo_original>
// kernel: tpu_custom_call.1
$region0: #{tpu_custom_call.1}
  #allocation0 [shape = 'u32[]', space=smem, size = 0x4, offset = 0x4, fixed_abs, tag = 'smem constant byte address 0x4 - core index']
  #allocation1 [shape = 'u32[144,128]{1,0:T(1,128)}', space=vmem, size = 0x12000, scoped, tag = 'internal scratch']
  #allocation2 [shape = 'f32[1]{0:T(128)S(6)}', space=smem, size = 0x200, scoped, tag = 'scoped memory for tpu_custom_call.1']
  %s0 = inlined_call_operand.<no memory space> [shape: f32[1], index: 0, kind: input, shape index: {}]
  %s1 = inlined_call_operand.vmem [shape: f32[64,26], index: 1, kind: input, shape index: {}]
  %s2 = inlined_call_operand.vmem [shape: f32[64,26], index: 2, kind: input, shape index: {}]
  %s3 = inlined_call_operand.vmem [shape: f32[26,16], index: 3, kind: input, shape index: {}]
  %s4 = inlined_call_operand.vmem [shape: f32[32,64], index: 4, kind: input, shape index: {}]
  %s5 = inlined_call_operand.hbm [shape: f32[1,1,128], index: 5, kind: output, shape index: {}]
  %s6 = sld [smem:[#allocation0]]
  $region30: #{tpu_custom_call.1} parent=0
    _
  %s8 = ssub.s32 1, %s6
  %s9 = scalar_select 0, %s8, %s6
  %10 = sst [smem:[#allocation2]] %s0
  $region1: #{tpu_custom_call.1} parent=0
    #allocation3 [shape = 'u8[512]{0}', space=vmem, size = 0x400, scoped, tag = 'output window, operand 0, single buffered']
    #allocation4 [shape = 's32[1]{0}', space=sflag, size = 0x4, scoped, tag = 'scoped memory for tpu_custom_call.1']
    %11 = vsyncpa [#allocation4], 0
    // Predicated region
    $region2: #{tpu_custom_call.1} parent=1 // pred_check
      _
    $region3: #{tpu_custom_call.1} parent=1 // pred_check_branch
      %13 = sbr.rel (0) target = $region5
    $region4: #{tpu_custom_call.1} parent=1 // pred_region
      _
    $region5: #{tpu_custom_call.1} parent=1 // pred_fallthru
      _
    // Predicated region
    $region6: #{tpu_custom_call.1} parent=1 // pred_check
      _
    $region7: #{tpu_custom_call.1} parent=1 // pred_check_branch
      %15 = sbr.rel (0) target = $region9
    $region8: #{tpu_custom_call.1} parent=1 // pred_region
      _
    $region9: #{tpu_custom_call.1} parent=1 // pred_fallthru
      _
    // Predicated region
    $region10: #{tpu_custom_call.1} parent=1 // pred_check
      _
    $region11: #{tpu_custom_call.1} parent=1 // pred_check_branch
      %17 = sbr.rel (0) target = $region13
    $region12: #{tpu_custom_call.1} parent=1 // pred_region
      _
    $region13: #{tpu_custom_call.1} parent=1 // pred_fallthru
      _
    // Predicated region
    $region14: #{tpu_custom_call.1} parent=1 // pred_check
      _
    $region15: #{tpu_custom_call.1} parent=1 // pred_check_branch
      %19 = sbr.rel (0) target = $region17
    $region16: #{tpu_custom_call.1} parent=1 // pred_region
      _
    $region17: #{tpu_custom_call.1} parent=1 // pred_fallthru
      _
    // Predicated region
    $region18: #{tpu_custom_call.1} parent=1 // pred_check
      _
    $region19: #{tpu_custom_call.1} parent=1 // pred_check_branch
      %21 = sbr.rel (0) target = $region21
    $region20: #{tpu_custom_call.1} parent=1 // pred_region
      _
    $region21: #{tpu_custom_call.1} parent=1 // pred_fallthru
      _
    %s22 = sld [smem:[#allocation2]]
    %s23 = smul.f32 %s22, %s22
    %s24 = smul.f32 %s23, %s23
    %s25 = smul.f32 %s24, 0.0001
    %s26 = smul.f32 %s24, 0.0009
    %v27 = vld [vmem:[%s1] sm:$0xff]
    %v28 = vld [vmem:[%s1 + $0x8] sm:$0xff]
    %v29 = vld [vmem:[%s1 + $0x10] sm:$0xff]
    %v30 = vld [vmem:[%s1 + $0x18] sm:$0xff]
    %v31 = vld [vmem:[%s1 + $0x20] sm:$0xff]
    %v32 = vld [vmem:[%s1 + $0x28] sm:$0xff]
    %v33 = vld [vmem:[%s1 + $0x30] sm:$0xff]
    %v34 = vld [vmem:[%s1 + $0x38] sm:$0xff]
    %v35 = vld [vmem:[%s2] sm:$0xff]
    %v36 = vld [vmem:[%s2 + $0x8] sm:$0xff]
    %v37 = vld [vmem:[%s2 + $0x10] sm:$0xff]
    %v38 = vld [vmem:[%s2 + $0x18] sm:$0xff]
    %v39 = vld [vmem:[%s2 + $0x20] sm:$0xff]
    %v40 = vld [vmem:[%s2 + $0x28] sm:$0xff]
    %v41 = vld [vmem:[%s2 + $0x30] sm:$0xff]
    %v42 = vld [vmem:[%s2 + $0x38] sm:$0xff]
    %v43 = vmul.f32 %v27, %v27
    %v44 = vmul.f32 %v28, %v28
    %v45 = vmul.f32 %v29, %v29
    %v46 = vmul.f32 %v30, %v30
    %v47 = vmul.f32 %v31, %v31
    %v48 = vmul.f32 %v32, %v32
    %v49 = vmul.f32 %v33, %v33
    %v50 = vmul.f32 %v34, %v34
    %v51 = vmul.f32 %v35, %v35
    %v52 = vmul.f32 %v36, %v36
    %v53 = vmul.f32 %v37, %v37
    %v54 = vmul.f32 %v38, %v38
    %v55 = vmul.f32 %v39, %v39
    %v56 = vmul.f32 %v40, %v40
    %v57 = vmul.f32 %v41, %v41
    %v58 = vmul.f32 %v42, %v42
    %v59 = vmul.f32 %v27, %v35
    %v60 = vmul.f32 %v28, %v36
    %v61 = vmul.f32 %v29, %v37
    %v62 = vmul.f32 %v30, %v38
    %v63 = vmul.f32 %v31, %v39
    %v64 = vmul.f32 %v32, %v40
    %v65 = vmul.f32 %v33, %v41
    %v66 = vmul.f32 %v34, %v42
    %v67 = vld [vmem:[%s3] sm:$0xff]
    %v68 = vld [vmem:[%s3 + $0x8] sm:$0xff]
    %v69 = vld [vmem:[%s3 + $0x10] sm:$0xff]
    %v70 = vld [vmem:[%s3 + $0x18] sm:$0x3]
    %vm71 = vcmask 211968
    %v73 = vsel %vm71, %v27, 0
    %v76 = vsel %vm71, %v28, 0
    %v79 = vsel %vm71, %v29, 0
    %v82 = vsel %vm71, %v30, 0
    %v85 = vsel %vm71, %v31, 0
    %v88 = vsel %vm71, %v32, 0
    %v91 = vsel %vm71, %v33, 0
    %v94 = vsel %vm71, %v34, 0
    %v97 = vsel %vm71, %v35, 0
    %v100 = vsel %vm71, %v36, 0
    %v103 = vsel %vm71, %v37, 0
    %v106 = vsel %vm71, %v38, 0
    %v109 = vsel %vm71, %v39, 0
    %v112 = vsel %vm71, %v40, 0
    %v115 = vsel %vm71, %v41, 0
    %v118 = vsel %vm71, %v42, 0
    %v121 = vsel %vm71, %v43, 0
    %v124 = vsel %vm71, %v44, 0
    %v127 = vsel %vm71, %v45, 0
    %v130 = vsel %vm71, %v46, 0
    %v133 = vsel %vm71, %v47, 0
    %v136 = vsel %vm71, %v48, 0
    %v139 = vsel %vm71, %v49, 0
    %v142 = vsel %vm71, %v50, 0
    %v145 = vsel %vm71, %v51, 0
    %v148 = vsel %vm71, %v52, 0
    %v151 = vsel %vm71, %v53, 0
    %v154 = vsel %vm71, %v54, 0
    %v157 = vsel %vm71, %v55, 0
    %v160 = vsel %vm71, %v56, 0
    %v163 = vsel %vm71, %v57, 0
    %v166 = vsel %vm71, %v58, 0
    %v169 = vsel %vm71, %v59, 0
    %v172 = vsel %vm71, %v60, 0
    %v175 = vsel %vm71, %v61, 0
    %v178 = vsel %vm71, %v62, 0
    %v181 = vsel %vm71, %v63, 0
    %v184 = vsel %vm71, %v64, 0
    %v187 = vsel %vm71, %v65, 0
    %v190 = vsel %vm71, %v66, 0
    %vm192 = vcmask 1041408
    %v194 = vsel %vm192, %v70, 0
    %196 = vmatprep.subr.mxu0 0.0
    %197 = vmatpush1.msra.mxu0 0.0
    %198 = vmatprep.subr.mxu0 0.0
    %199 = vmatpush1.msra.mxu0 0.0
    %200 = vmatprep.subr.mxu0 0.0
    %201 = vmatpush1.msra.mxu0 0.0
    %202 = vmatprep.subr.mxu0 0.0
    %203 = vmatpush1.msra.mxu0 0.0
    %204 = vmatprep.subr.mxu0 0.0
    %205 = vmatpush1.msra.mxu0 0.0
    %206 = vmatprep.subr.mxu0 0.0
    %207 = vmatpush1.msra.mxu0 0.0
    %208 = vmatprep.subr.mxu0 0.0
    %209 = vmatpush1.msra.mxu0 0.0
    %210 = vmatprep.subr.mxu0 0.0
    %211 = vmatpush1.msra.mxu0 0.0
    %212 = vmatprep.subr.mxu0 0.0
    %213 = vmatpush1.msra.mxu0 0.0
    %214 = vmatprep.subr.mxu0 0.0
    %215 = vmatpush1.msra.mxu0 0.0
    %216 = vmatprep.subr.mxu0 0.0
    %217 = vmatpush1.msra.mxu0 0.0
    %218 = vmatprep.subr.mxu0 0.0
    %219 = vmatpush1.msra.mxu0 0.0
    %220 = vmatprep.subr.mxu0 0.0
    %221 = vmatpush1.msra.mxu0 %v194
    %222 = vmatprep.subr.mxu0 0.0
    %223 = vmatpush1.msra.mxu0 %v69
    %224 = vmatprep.subr.mxu0 0.0
    %225 = vmatpush1.msra.mxu0 %v68
    %226 = vmatprep.subr.mxu0 0.0
    %227 = vmatpush1.msra.mxu0 %v67
    %228 = vmatprep.subr.mxu0 0.0
    %229 = vmatpush2.msra.mxu0 0.0
    %230 = vmatprep.subr.mxu0 0.0
    %231 = vmatpush2.msra.mxu0 0.0
    %232 = vmatprep.subr.mxu0 0.0
    %233 = vmatpush2.msra.mxu0 0.0
    %234 = vmatprep.subr.mxu0 0.0
    %235 = vmatpush2.msra.mxu0 0.0
    %236 = vmatprep.subr.mxu0 0.0
    %237 = vmatpush2.msra.mxu0 0.0
    %238 = vmatprep.subr.mxu0 0.0
    %239 = vmatpush2.msra.mxu0 0.0
    %240 = vmatprep.subr.mxu0 0.0
    %241 = vmatpush2.msra.mxu0 0.0
    %242 = vmatprep.subr.mxu0 0.0
    %243 = vmatpush2.msra.mxu0 0.0
    %244 = vmatprep.subr.mxu0 0.0
    %245 = vmatpush2.msra.mxu0 0.0
    %246 = vmatprep.subr.mxu0 0.0
    %247 = vmatpush2.msra.mxu0 0.0
    %248 = vmatprep.subr.mxu0 0.0
    %249 = vmatpush2.msra.mxu0 0.0
    %250 = vmatprep.subr.mxu0 0.0
    %251 = vmatpush2.msra.mxu0 0.0
    %252 = vmatprep.subr.mxu0 0.0
    %253 = vmatpush2.msra.mxu0 0.0
    %254 = vmatprep.subr.mxu0 0.0
    %255 = vmatpush2.msra.mxu0 0.0
    %256 = vmatprep.subr.mxu0 0.0
    %257 = vmatpush2.msra.mxu0 0.0
    %258 = vmatprep.subr.mxu0 0.0
    %259 = vmatpush2.msra.mxu0 0.0
    %260 = vmatprep.mubr.f32.mxu0 0.0
    %261 = vmatmul.mubr.f32.gmra.mxu0 %v73
    %v262 = vpop.f32.mrf.mxu0
    %v263 = vadd.f32 0.0, %v262
    %v264 = vpop.f32.mrf.mxu0
    %265 = vmatprep.mubr.f32.mxu0 0.0
    %266 = vmatmul.mubr.f32.gmra.mxu0 %v76
    %v267 = vpop.f32.mrf.mxu0
    %v268 = vadd.f32 0.0, %v267
    %v269 = vpop.f32.mrf.mxu0
    %270 = vmatprep.mubr.f32.mxu0 0.0
    %271 = vmatmul.mubr.f32.gmra.mxu0 %v79
    %v272 = vpop.f32.mrf.mxu0
    %v273 = vadd.f32 0.0, %v272
    %v274 = vpop.f32.mrf.mxu0
    %275 = vmatprep.mubr.f32.mxu0 0.0
    %276 = vmatmul.mubr.f32.gmra.mxu0 %v82
    %v277 = vpop.f32.mrf.mxu0
    %v278 = vadd.f32 0.0, %v277
    %v279 = vpop.f32.mrf.mxu0
    %280 = vmatprep.mubr.f32.mxu0 0.0
    %281 = vmatmul.mubr.f32.gmra.mxu0 %v85
    %v282 = vpop.f32.mrf.mxu0
    %v283 = vadd.f32 0.0, %v282
    %v284 = vpop.f32.mrf.mxu0
    %285 = vmatprep.mubr.f32.mxu0 0.0
    %286 = vmatmul.mubr.f32.gmra.mxu0 %v88
    %v287 = vpop.f32.mrf.mxu0
    %v288 = vadd.f32 0.0, %v287
    %v289 = vpop.f32.mrf.mxu0
    %290 = vmatprep.mubr.f32.mxu0 0.0
    %291 = vmatmul.mubr.f32.gmra.mxu0 %v91
    %v292 = vpop.f32.mrf.mxu0
    %v293 = vadd.f32 0.0, %v292
    %v294 = vpop.f32.mrf.mxu0
    %295 = vmatprep.mubr.f32.mxu0 0.0
    %296 = vmatmul.mubr.f32.gmra.mxu0 %v94
    %v297 = vpop.f32.mrf.mxu0
    %v298 = vadd.f32 0.0, %v297
    %v299 = vpop.f32.mrf.mxu0
    %300 = vmatprep.mubr.f32.mxu0 0.0
    %301 = vmatmul.mubr.f32.gmra.mxu0 %v97
    %v302 = vpop.f32.mrf.mxu0
    %v303 = vadd.f32 0.0, %v302
    %v304 = vpop.f32.mrf.mxu0
    %305 = vmatprep.mubr.f32.mxu0 0.0
    %306 = vmatmul.mubr.f32.gmra.mxu0 %v100
    %v307 = vpop.f32.mrf.mxu0
    %v308 = vadd.f32 0.0, %v307
    %v309 = vpop.f32.mrf.mxu0
    %310 = vmatprep.mubr.f32.mxu0 0.0
    %311 = vmatmul.mubr.f32.gmra.mxu0 %v103
    %v312 = vpop.f32.mrf.mxu0
    %v313 = vadd.f32 0.0, %v312
    %v314 = vpop.f32.mrf.mxu0
    %315 = vmatprep.mubr.f32.mxu0 0.0
    %316 = vmatmul.mubr.f32.gmra.mxu0 %v106
    %v317 = vpop.f32.mrf.mxu0
    %v318 = vadd.f32 0.0, %v317
    %v319 = vpop.f32.mrf.mxu0
    %320 = vmatprep.mubr.f32.mxu0 0.0
    %321 = vmatmul.mubr.f32.gmra.mxu0 %v109
    %v322 = vpop.f32.mrf.mxu0
    %v323 = vadd.f32 0.0, %v322
    %v324 = vpop.f32.mrf.mxu0
    %325 = vmatprep.mubr.f32.mxu0 0.0
    %326 = vmatmul.mubr.f32.gmra.mxu0 %v112
    %v327 = vpop.f32.mrf.mxu0
    %v328 = vadd.f32 0.0, %v327
    %v329 = vpop.f32.mrf.mxu0
    %330 = vmatprep.mubr.f32.mxu0 0.0
    %331 = vmatmul.mubr.f32.gmra.mxu0 %v115
    %v332 = vpop.f32.mrf.mxu0
    %v333 = vadd.f32 0.0, %v332
    %v334 = vpop.f32.mrf.mxu0
    %335 = vmatprep.mubr.f32.mxu0 0.0
    %336 = vmatmul.mubr.f32.gmra.mxu0 %v118
    %v337 = vpop.f32.mrf.mxu0
    %v338 = vadd.f32 0.0, %v337
    %v339 = vpop.f32.mrf.mxu0
    %340 = vmatprep.mubr.f32.mxu0 0.0
    %341 = vmatmul.mubr.f32.gmra.mxu0 %v121
    %v342 = vpop.f32.mrf.mxu0
    %v343 = vadd.f32 0.0, %v342
    %v344 = vpop.f32.mrf.mxu0
    %345 = vmatprep.mubr.f32.mxu0 0.0
    %346 = vmatmul.mubr.f32.gmra.mxu0 %v124
    %v347 = vpop.f32.mrf.mxu0
    %v348 = vadd.f32 0.0, %v347
    %v349 = vpop.f32.mrf.mxu0
    %350 = vmatprep.mubr.f32.mxu0 0.0
    %351 = vmatmul.mubr.f32.gmra.mxu0 %v127
    %v352 = vpop.f32.mrf.mxu0
    %v353 = vadd.f32 0.0, %v352
    %v354 = vpop.f32.mrf.mxu0
    %355 = vmatprep.mubr.f32.mxu0 0.0
    %356 = vmatmul.mubr.f32.gmra.mxu0 %v130
    %v357 = vpop.f32.mrf.mxu0
    %v358 = vadd.f32 0.0, %v357
    %v359 = vpop.f32.mrf.mxu0
    %360 = vmatprep.mubr.f32.mxu0 0.0
    %361 = vmatmul.mubr.f32.gmra.mxu0 %v133
    %v362 = vpop.f32.mrf.mxu0
    %v363 = vadd.f32 0.0, %v362
    %v364 = vpop.f32.mrf.mxu0
    %365 = vmatprep.mubr.f32.mxu0 0.0
    %366 = vmatmul.mubr.f32.gmra.mxu0 %v136
    %v367 = vpop.f32.mrf.mxu0
    %v368 = vadd.f32 0.0, %v367
    %v369 = vpop.f32.mrf.mxu0
    %370 = vmatprep.mubr.f32.mxu0 0.0
    %371 = vmatmul.mubr.f32.gmra.mxu0 %v139
    %v372 = vpop.f32.mrf.mxu0
    %v373 = vadd.f32 0.0, %v372
    %v374 = vpop.f32.mrf.mxu0
    %375 = vmatprep.mubr.f32.mxu0 0.0
    %376 = vmatmul.mubr.f32.gmra.mxu0 %v142
    %v377 = vpop.f32.mrf.mxu0
    %v378 = vadd.f32 0.0, %v377
    %v379 = vpop.f32.mrf.mxu0
    %380 = vmatprep.mubr.f32.mxu0 0.0
    %381 = vmatmul.mubr.f32.gmra.mxu0 %v145
    %v382 = vpop.f32.mrf.mxu0
    %v383 = vadd.f32 0.0, %v382
    %v384 = vpop.f32.mrf.mxu0
    %385 = vmatprep.mubr.f32.mxu0 0.0
    %386 = vmatmul.mubr.f32.gmra.mxu0 %v148
    %v387 = vpop.f32.mrf.mxu0
    %v388 = vadd.f32 0.0, %v387
    %v389 = vpop.f32.mrf.mxu0
    %390 = vmatprep.mubr.f32.mxu0 0.0
    %391 = vmatmul.mubr.f32.gmra.mxu0 %v151
    %v392 = vpop.f32.mrf.mxu0
    %v393 = vadd.f32 0.0, %v392
    %v394 = vpop.f32.mrf.mxu0
    %395 = vmatprep.mubr.f32.mxu0 0.0
    %396 = vmatmul.mubr.f32.gmra.mxu0 %v154
    %v397 = vpop.f32.mrf.mxu0
    %v398 = vadd.f32 0.0, %v397
    %v399 = vpop.f32.mrf.mxu0
    %400 = vmatprep.mubr.f32.mxu0 0.0
    %401 = vmatmul.mubr.f32.gmra.mxu0 %v157
    %v402 = vpop.f32.mrf.mxu0
    %v403 = vadd.f32 0.0, %v402
    %v404 = vpop.f32.mrf.mxu0
    %405 = vmatprep.mubr.f32.mxu0 0.0
    %406 = vmatmul.mubr.f32.gmra.mxu0 %v160
    %v407 = vpop.f32.mrf.mxu0
    %v408 = vadd.f32 0.0, %v407
    %v409 = vpop.f32.mrf.mxu0
    %410 = vmatprep.mubr.f32.mxu0 0.0
    %411 = vmatmul.mubr.f32.gmra.mxu0 %v163
    %v412 = vpop.f32.mrf.mxu0
    %v413 = vadd.f32 0.0, %v412
    %v414 = vpop.f32.mrf.mxu0
    %415 = vmatprep.mubr.f32.mxu0 0.0
    %416 = vmatmul.mubr.f32.gmra.mxu0 %v166
    %v417 = vpop.f32.mrf.mxu0
    %v418 = vadd.f32 0.0, %v417
    %v419 = vpop.f32.mrf.mxu0
    %420 = vmatprep.mubr.f32.mxu0 0.0
    %421 = vmatmul.mubr.f32.gmra.mxu0 %v169
    %v422 = vpop.f32.mrf.mxu0
    %v423 = vadd.f32 0.0, %v422
    %v424 = vpop.f32.mrf.mxu0
    %425 = vmatprep.mubr.f32.mxu0 0.0
    %426 = vmatmul.mubr.f32.gmra.mxu0 %v172
    %v427 = vpop.f32.mrf.mxu0
    %v428 = vadd.f32 0.0, %v427
    %v429 = vpop.f32.mrf.mxu0
    %430 = vmatprep.mubr.f32.mxu0 0.0
    %431 = vmatmul.mubr.f32.gmra.mxu0 %v175
    %v432 = vpop.f32.mrf.mxu0
    %v433 = vadd.f32 0.0, %v432
    %v434 = vpop.f32.mrf.mxu0
    %435 = vmatprep.mubr.f32.mxu0 0.0
    %436 = vmatmul.mubr.f32.gmra.mxu0 %v178
    %v437 = vpop.f32.mrf.mxu0
    %v438 = vadd.f32 0.0, %v437
    %v439 = vpop.f32.mrf.mxu0
    %440 = vmatprep.mubr.f32.mxu0 0.0
    %441 = vmatmul.mubr.f32.gmra.mxu0 %v181
    %v442 = vpop.f32.mrf.mxu0
    %v443 = vadd.f32 0.0, %v442
    %v444 = vpop.f32.mrf.mxu0
    %445 = vmatprep.mubr.f32.mxu0 0.0
    %446 = vmatmul.mubr.f32.gmra.mxu0 %v184
    %v447 = vpop.f32.mrf.mxu0
    %v448 = vadd.f32 0.0, %v447
    %v449 = vpop.f32.mrf.mxu0
    %450 = vmatprep.mubr.f32.mxu0 0.0
    %451 = vmatmul.mubr.f32.gmra.mxu0 %v187
    %v452 = vpop.f32.mrf.mxu0
    %v453 = vadd.f32 0.0, %v452
    %v454 = vpop.f32.mrf.mxu0
    %455 = vmatprep.mubr.f32.mxu0 0.0
    %456 = vmatmul.mubr.f32.gmra.mxu0 %v190
    %v457 = vpop.f32.mrf.mxu0
    %v458 = vadd.f32 0.0, %v457
    %v459 = vpop.f32.mrf.mxu0
    %460 = vdwg.mxu0
    %v461 = vld [vmem:[%s4] sm:$0xff]
    %v462 = vld [vmem:[%s4 + $0x8] sm:$0xff]
    %v463 = vld [vmem:[%s4 + $0x10] sm:$0xff]
    %v464 = vld [vmem:[%s4 + $0x18] sm:$0xff]
    %vm465 = vcmask 523264
    %v467 = vsel %vm465, %v461, 0
    %v470 = vsel %vm465, %v462, 0
    %v473 = vsel %vm465, %v463, 0
    %v476 = vsel %vm465, %v464, 0
    %478 = vmatprep.subr.mxu0 0.0
    %479 = vmatpush1.msra.mxu0 0.0
    %480 = vmatprep.subr.mxu0 0.0
    %481 = vmatpush1.msra.mxu0 0.0
    %482 = vmatprep.subr.mxu0 0.0
    %483 = vmatpush1.msra.mxu0 0.0
    %484 = vmatprep.subr.mxu0 0.0
    %485 = vmatpush1.msra.mxu0 0.0
    %486 = vmatprep.subr.mxu0 0.0
    %487 = vmatpush1.msra.mxu0 0.0
    %488 = vmatprep.subr.mxu0 0.0
    %489 = vmatpush1.msra.mxu0 0.0
    %490 = vmatprep.subr.mxu0 0.0
    %491 = vmatpush1.msra.mxu0 0.0
    %492 = vmatprep.subr.mxu0 0.0
    %493 = vmatpush1.msra.mxu0 0.0
    %494 = vmatprep.subr.mxu0 0.0
    %495 = vmatpush1.msra.mxu0 %v298
    %496 = vmatprep.subr.mxu0 0.0
    %497 = vmatpush1.msra.mxu0 %v293
    %498 = vmatprep.subr.mxu0 0.0
    %499 = vmatpush1.msra.mxu0 %v288
    %500 = vmatprep.subr.mxu0 0.0
    %501 = vmatpush1.msra.mxu0 %v283
    %502 = vmatprep.subr.mxu0 0.0
    %503 = vmatpush1.msra.mxu0 %v278
    %504 = vmatprep.subr.mxu0 0.0
    %505 = vmatpush1.msra.mxu0 %v273
    %506 = vmatprep.subr.mxu0 0.0
    %507 = vmatpush1.msra.mxu0 %v268
    %508 = vmatprep.subr.mxu0 0.0
    %509 = vmatpush1.msra.mxu0 %v263
    %510 = vmatprep.subr.mxu0 0.0
    %511 = vmatpush2.msra.mxu0 0.0
    %512 = vmatprep.subr.mxu0 0.0
    %513 = vmatpush2.msra.mxu0 0.0
    %514 = vmatprep.subr.mxu0 0.0
    %515 = vmatpush2.msra.mxu0 0.0
    %516 = vmatprep.subr.mxu0 0.0
    %517 = vmatpush2.msra.mxu0 0.0
    %518 = vmatprep.subr.mxu0 0.0
    %519 = vmatpush2.msra.mxu0 0.0
    %520 = vmatprep.subr.mxu0 0.0
    %521 = vmatpush2.msra.mxu0 0.0
    %522 = vmatprep.subr.mxu0 0.0
    %523 = vmatpush2.msra.mxu0 0.0
    %524 = vmatprep.subr.mxu0 0.0
    %525 = vmatpush2.msra.mxu0 0.0
    %526 = vmatprep.subr.mxu0 0.0
    %527 = vmatpush2.msra.mxu0 0.0
    %528 = vmatprep.subr.mxu0 0.0
    %529 = vmatpush2.msra.mxu0 0.0
    %530 = vmatprep.subr.mxu0 0.0
    %531 = vmatpush2.msra.mxu0 0.0
    %532 = vmatprep.subr.mxu0 0.0
    %533 = vmatpush2.msra.mxu0 0.0
    %534 = vmatprep.subr.mxu0 0.0
    %535 = vmatpush2.msra.mxu0 0.0
    %536 = vmatprep.subr.mxu0 0.0
    %537 = vmatpush2.msra.mxu0 0.0
    %538 = vmatprep.subr.mxu0 0.0
    %539 = vmatpush2.msra.mxu0 0.0
    %540 = vmatprep.subr.mxu0 0.0
    %541 = vmatpush2.msra.mxu0 0.0
    %542 = vmatprep.mubr.f32.mxu0 0.0
    %543 = vmatmul.mubr.f32.gmra.mxu0 %v467
    %v544 = vpop.f32.mrf.mxu0
    %v545 = vadd.f32 0.0, %v544
    %v546 = vpop.f32.mrf.mxu0
    %547 = vmatprep.mubr.f32.mxu0 0.0
    %548 = vmatmul.mubr.f32.gmra.mxu0 %v470
    %v549 = vpop.f32.mrf.mxu0
    %v550 = vadd.f32 0.0, %v549
    %v551 = vpop.f32.mrf.mxu0
    %552 = vmatprep.mubr.f32.mxu0 0.0
    %553 = vmatmul.mubr.f32.gmra.mxu0 %v473
    %v554 = vpop.f32.mrf.mxu0
    %v555 = vadd.f32 0.0, %v554
    %v556 = vpop.f32.mrf.mxu0
    %557 = vmatprep.mubr.f32.mxu0 0.0
    %558 = vmatmul.mubr.f32.gmra.mxu0 %v476
    %v559 = vpop.f32.mrf.mxu0
    %v560 = vadd.f32 0.0, %v559
    %v561 = vpop.f32.mrf.mxu0
    %562 = vdwg.mxu0
    %563 = vmatprep.subr.mxu0 0.0
    %564 = vmatpush1.msra.mxu0 0.0
    %565 = vmatprep.subr.mxu0 0.0
    %566 = vmatpush1.msra.mxu0 0.0
    %567 = vmatprep.subr.mxu0 0.0
    %568 = vmatpush1.msra.mxu0 0.0
    %569 = vmatprep.subr.mxu0 0.0
    %570 = vmatpush1.msra.mxu0 0.0
    %571 = vmatprep.subr.mxu0 0.0
    %572 = vmatpush1.msra.mxu0 0.0
    %573 = vmatprep.subr.mxu0 0.0
    %574 = vmatpush1.msra.mxu0 0.0
    %575 = vmatprep.subr.mxu0 0.0
    %576 = vmatpush1.msra.mxu0 0.0
    %577 = vmatprep.subr.mxu0 0.0
    %578 = vmatpush1.msra.mxu0 0.0
    %579 = vmatprep.subr.mxu0 0.0
    %580 = vmatpush1.msra.mxu0 %v338
    %581 = vmatprep.subr.mxu0 0.0
    %582 = vmatpush1.msra.mxu0 %v333
    %583 = vmatprep.subr.mxu0 0.0
    %584 = vmatpush1.msra.mxu0 %v328
    %585 = vmatprep.subr.mxu0 0.0
    %586 = vmatpush1.msra.mxu0 %v323
    %587 = vmatprep.subr.mxu0 0.0
    %588 = vmatpush1.msra.mxu0 %v318
    %589 = vmatprep.subr.mxu0 0.0
    %590 = vmatpush1.msra.mxu0 %v313
    %591 = vmatprep.subr.mxu0 0.0
    %592 = vmatpush1.msra.mxu0 %v308
    %593 = vmatprep.subr.mxu0 0.0
    %594 = vmatpush1.msra.mxu0 %v303
    %595 = vmatprep.subr.mxu0 0.0
    %596 = vmatpush2.msra.mxu0 0.0
    %597 = vmatprep.subr.mxu0 0.0
    %598 = vmatpush2.msra.mxu0 0.0
    %599 = vmatprep.subr.mxu0 0.0
    %600 = vmatpush2.msra.mxu0 0.0
    %601 = vmatprep.subr.mxu0 0.0
    %602 = vmatpush2.msra.mxu0 0.0
    %603 = vmatprep.subr.mxu0 0.0
    %604 = vmatpush2.msra.mxu0 0.0
    %605 = vmatprep.subr.mxu0 0.0
    %606 = vmatpush2.msra.mxu0 0.0
    %607 = vmatprep.subr.mxu0 0.0
    %608 = vmatpush2.msra.mxu0 0.0
    %609 = vmatprep.subr.mxu0 0.0
    %610 = vmatpush2.msra.mxu0 0.0
    %611 = vmatprep.subr.mxu0 0.0
    %612 = vmatpush2.msra.mxu0 0.0
    %613 = vmatprep.subr.mxu0 0.0
    %614 = vmatpush2.msra.mxu0 0.0
    %615 = vmatprep.subr.mxu0 0.0
    %616 = vmatpush2.msra.mxu0 0.0
    %617 = vmatprep.subr.mxu0 0.0
    %618 = vmatpush2.msra.mxu0 0.0
    %619 = vmatprep.subr.mxu0 0.0
    %620 = vmatpush2.msra.mxu0 0.0
    %621 = vmatprep.subr.mxu0 0.0
    %622 = vmatpush2.msra.mxu0 0.0
    %623 = vmatprep.subr.mxu0 0.0
    %624 = vmatpush2.msra.mxu0 0.0
    %625 = vmatprep.subr.mxu0 0.0
    %626 = vmatpush2.msra.mxu0 0.0
    %627 = vmatprep.mubr.f32.mxu0 0.0
    %628 = vmatmul.mubr.f32.gmra.mxu0 %v467
    %v629 = vpop.f32.mrf.mxu0
    %v630 = vadd.f32 0.0, %v629
    %v631 = vpop.f32.mrf.mxu0
    %632 = vmatprep.mubr.f32.mxu0 0.0
    %633 = vmatmul.mubr.f32.gmra.mxu0 %v470
    %v634 = vpop.f32.mrf.mxu0
    %v635 = vadd.f32 0.0, %v634
    %v636 = vpop.f32.mrf.mxu0
    %637 = vmatprep.mubr.f32.mxu0 0.0
    %638 = vmatmul.mubr.f32.gmra.mxu0 %v473
    %v639 = vpop.f32.mrf.mxu0
    %v640 = vadd.f32 0.0, %v639
    %v641 = vpop.f32.mrf.mxu0
    %642 = vmatprep.mubr.f32.mxu0 0.0
    %643 = vmatmul.mubr.f32.gmra.mxu0 %v476
    %v644 = vpop.f32.mrf.mxu0
    %v645 = vadd.f32 0.0, %v644
    %v646 = vpop.f32.mrf.mxu0
    %647 = vdwg.mxu0
    %648 = vmatprep.subr.mxu0 0.0
    %649 = vmatpush1.msra.mxu0 0.0
    %650 = vmatprep.subr.mxu0 0.0
    %651 = vmatpush1.msra.mxu0 0.0
    %652 = vmatprep.subr.mxu0 0.0
    %653 = vmatpush1.msra.mxu0 0.0
    %654 = vmatprep.subr.mxu0 0.0
    %655 = vmatpush1.msra.mxu0 0.0
    %656 = vmatprep.subr.mxu0 0.0
    %657 = vmatpush1.msra.mxu0 0.0
    %658 = vmatprep.subr.mxu0 0.0
    %659 = vmatpush1.msra.mxu0 0.0
    %660 = vmatprep.subr.mxu0 0.0
    %661 = vmatpush1.msra.mxu0 0.0
    %662 = vmatprep.subr.mxu0 0.0
    %663 = vmatpush1.msra.mxu0 0.0
    %664 = vmatprep.subr.mxu0 0.0
    %665 = vmatpush1.msra.mxu0 %v378
    %666 = vmatprep.subr.mxu0 0.0
    %667 = vmatpush1.msra.mxu0 %v373
    %668 = vmatprep.subr.mxu0 0.0
    %669 = vmatpush1.msra.mxu0 %v368
    %670 = vmatprep.subr.mxu0 0.0
    %671 = vmatpush1.msra.mxu0 %v363
    %672 = vmatprep.subr.mxu0 0.0
    %673 = vmatpush1.msra.mxu0 %v358
    %674 = vmatprep.subr.mxu0 0.0
    %675 = vmatpush1.msra.mxu0 %v353
    %676 = vmatprep.subr.mxu0 0.0
    %677 = vmatpush1.msra.mxu0 %v348
    %678 = vmatprep.subr.mxu0 0.0
    %679 = vmatpush1.msra.mxu0 %v343
    %680 = vmatprep.subr.mxu0 0.0
    %681 = vmatpush2.msra.mxu0 0.0
    %682 = vmatprep.subr.mxu0 0.0
    %683 = vmatpush2.msra.mxu0 0.0
    %684 = vmatprep.subr.mxu0 0.0
    %685 = vmatpush2.msra.mxu0 0.0
    %686 = vmatprep.subr.mxu0 0.0
    %687 = vmatpush2.msra.mxu0 0.0
    %688 = vmatprep.subr.mxu0 0.0
    %689 = vmatpush2.msra.mxu0 0.0
    %690 = vmatprep.subr.mxu0 0.0
    %691 = vmatpush2.msra.mxu0 0.0
    %692 = vmatprep.subr.mxu0 0.0
    %693 = vmatpush2.msra.mxu0 0.0
    %694 = vmatprep.subr.mxu0 0.0
    %695 = vmatpush2.msra.mxu0 0.0
    %696 = vmatprep.subr.mxu0 0.0
    %697 = vmatpush2.msra.mxu0 0.0
    %698 = vmatprep.subr.mxu0 0.0
    %699 = vmatpush2.msra.mxu0 0.0
    %700 = vmatprep.subr.mxu0 0.0
    %701 = vmatpush2.msra.mxu0 0.0
    %702 = vmatprep.subr.mxu0 0.0
    %703 = vmatpush2.msra.mxu0 0.0
    %704 = vmatprep.subr.mxu0 0.0
    %705 = vmatpush2.msra.mxu0 0.0
    %706 = vmatprep.subr.mxu0 0.0
    %707 = vmatpush2.msra.mxu0 0.0
    %708 = vmatprep.subr.mxu0 0.0
    %709 = vmatpush2.msra.mxu0 0.0
    %710 = vmatprep.subr.mxu0 0.0
    %711 = vmatpush2.msra.mxu0 0.0
    %712 = vmatprep.mubr.f32.mxu0 0.0
    %713 = vmatmul.mubr.f32.gmra.mxu0 %v467
    %v714 = vpop.f32.mrf.mxu0
    %v715 = vadd.f32 0.0, %v714
    %v716 = vpop.f32.mrf.mxu0
    %717 = vmatprep.mubr.f32.mxu0 0.0
    %718 = vmatmul.mubr.f32.gmra.mxu0 %v470
    %v719 = vpop.f32.mrf.mxu0
    %v720 = vadd.f32 0.0, %v719
    %v721 = vpop.f32.mrf.mxu0
    %722 = vmatprep.mubr.f32.mxu0 0.0
    %723 = vmatmul.mubr.f32.gmra.mxu0 %v473
    %v724 = vpop.f32.mrf.mxu0
    %v725 = vadd.f32 0.0, %v724
    %v726 = vpop.f32.mrf.mxu0
    %727 = vmatprep.mubr.f32.mxu0 0.0
    %728 = vmatmul.mubr.f32.gmra.mxu0 %v476
    %v729 = vpop.f32.mrf.mxu0
    %v730 = vadd.f32 0.0, %v729
    %v731 = vpop.f32.mrf.mxu0
    %732 = vdwg.mxu0
    %733 = vmatprep.subr.mxu0 0.0
    %734 = vmatpush1.msra.mxu0 0.0
    %735 = vmatprep.subr.mxu0 0.0
    %736 = vmatpush1.msra.mxu0 0.0
    %737 = vmatprep.subr.mxu0 0.0
    %738 = vmatpush1.msra.mxu0 0.0
    %739 = vmatprep.subr.mxu0 0.0
    %740 = vmatpush1.msra.mxu0 0.0
    %741 = vmatprep.subr.mxu0 0.0
    %742 = vmatpush1.msra.mxu0 0.0
    %743 = vmatprep.subr.mxu0 0.0
    %744 = vmatpush1.msra.mxu0 0.0
    %745 = vmatprep.subr.mxu0 0.0
    %746 = vmatpush1.msra.mxu0 0.0
    %747 = vmatprep.subr.mxu0 0.0
    %748 = vmatpush1.msra.mxu0 0.0
    %749 = vmatprep.subr.mxu0 0.0
    %750 = vmatpush1.msra.mxu0 %v418
    %751 = vmatprep.subr.mxu0 0.0
    %752 = vmatpush1.msra.mxu0 %v413
    %753 = vmatprep.subr.mxu0 0.0
    %754 = vmatpush1.msra.mxu0 %v408
    %755 = vmatprep.subr.mxu0 0.0
    %756 = vmatpush1.msra.mxu0 %v403
    %757 = vmatprep.subr.mxu0 0.0
    %758 = vmatpush1.msra.mxu0 %v398
    %759 = vmatprep.subr.mxu0 0.0
    %760 = vmatpush1.msra.mxu0 %v393
    %761 = vmatprep.subr.mxu0 0.0
    %762 = vmatpush1.msra.mxu0 %v388
    %763 = vmatprep.subr.mxu0 0.0
    %764 = vmatpush1.msra.mxu0 %v383
    %765 = vmatprep.subr.mxu0 0.0
    %766 = vmatpush2.msra.mxu0 0.0
    %767 = vmatprep.subr.mxu0 0.0
    %768 = vmatpush2.msra.mxu0 0.0
    %769 = vmatprep.subr.mxu0 0.0
    %770 = vmatpush2.msra.mxu0 0.0
    %771 = vmatprep.subr.mxu0 0.0
    %772 = vmatpush2.msra.mxu0 0.0
    %773 = vmatprep.subr.mxu0 0.0
    %774 = vmatpush2.msra.mxu0 0.0
    %775 = vmatprep.subr.mxu0 0.0
    %776 = vmatpush2.msra.mxu0 0.0
    %777 = vmatprep.subr.mxu0 0.0
    %778 = vmatpush2.msra.mxu0 0.0
    %779 = vmatprep.subr.mxu0 0.0
    %780 = vmatpush2.msra.mxu0 0.0
    %781 = vmatprep.subr.mxu0 0.0
    %782 = vmatpush2.msra.mxu0 0.0
    %783 = vmatprep.subr.mxu0 0.0
    %784 = vmatpush2.msra.mxu0 0.0
    %785 = vmatprep.subr.mxu0 0.0
    %786 = vmatpush2.msra.mxu0 0.0
    %787 = vmatprep.subr.mxu0 0.0
    %788 = vmatpush2.msra.mxu0 0.0
    %789 = vmatprep.subr.mxu0 0.0
    %790 = vmatpush2.msra.mxu0 0.0
    %791 = vmatprep.subr.mxu0 0.0
    %792 = vmatpush2.msra.mxu0 0.0
    %793 = vmatprep.subr.mxu0 0.0
    %794 = vmatpush2.msra.mxu0 0.0
    %795 = vmatprep.subr.mxu0 0.0
    %796 = vmatpush2.msra.mxu0 0.0
    %797 = vmatprep.mubr.f32.mxu0 0.0
    %798 = vmatmul.mubr.f32.gmra.mxu0 %v467
    %v799 = vpop.f32.mrf.mxu0
    %v800 = vadd.f32 0.0, %v799
    %v801 = vpop.f32.mrf.mxu0
    %802 = vmatprep.mubr.f32.mxu0 0.0
    %803 = vmatmul.mubr.f32.gmra.mxu0 %v470
    %v804 = vpop.f32.mrf.mxu0
    %v805 = vadd.f32 0.0, %v804
    %v806 = vpop.f32.mrf.mxu0
    %807 = vmatprep.mubr.f32.mxu0 0.0
    %808 = vmatmul.mubr.f32.gmra.mxu0 %v473
    %v809 = vpop.f32.mrf.mxu0
    %v810 = vadd.f32 0.0, %v809
    %v811 = vpop.f32.mrf.mxu0
    %812 = vmatprep.mubr.f32.mxu0 0.0
    %813 = vmatmul.mubr.f32.gmra.mxu0 %v476
    %v814 = vpop.f32.mrf.mxu0
    %v815 = vadd.f32 0.0, %v814
    %v816 = vpop.f32.mrf.mxu0
    %817 = vdwg.mxu0
    %818 = vmatprep.subr.mxu0 0.0
    %819 = vmatpush1.msra.mxu0 0.0
    %820 = vmatprep.subr.mxu0 0.0
    %821 = vmatpush1.msra.mxu0 0.0
    %822 = vmatprep.subr.mxu0 0.0
    %823 = vmatpush1.msra.mxu0 0.0
    %824 = vmatprep.subr.mxu0 0.0
    %825 = vmatpush1.msra.mxu0 0.0
    %826 = vmatprep.subr.mxu0 0.0
    %827 = vmatpush1.msra.mxu0 0.0
    %828 = vmatprep.subr.mxu0 0.0
    %829 = vmatpush1.msra.mxu0 0.0
    %830 = vmatprep.subr.mxu0 0.0
    %831 = vmatpush1.msra.mxu0 0.0
    %832 = vmatprep.subr.mxu0 0.0
    %833 = vmatpush1.msra.mxu0 0.0
    %834 = vmatprep.subr.mxu0 0.0
    %835 = vmatpush1.msra.mxu0 %v458
    %836 = vmatprep.subr.mxu0 0.0
    %837 = vmatpush1.msra.mxu0 %v453
    %838 = vmatprep.subr.mxu0 0.0
    %839 = vmatpush1.msra.mxu0 %v448
    %840 = vmatprep.subr.mxu0 0.0
    %841 = vmatpush1.msra.mxu0 %v443
    %842 = vmatprep.subr.mxu0 0.0
    %843 = vmatpush1.msra.mxu0 %v438
    %844 = vmatprep.subr.mxu0 0.0
    %845 = vmatpush1.msra.mxu0 %v433
    %846 = vmatprep.subr.mxu0 0.0
    %847 = vmatpush1.msra.mxu0 %v428
    %848 = vmatprep.subr.mxu0 0.0
    %849 = vmatpush1.msra.mxu0 %v423
    %850 = vmatprep.subr.mxu0 0.0
    %851 = vmatpush2.msra.mxu0 0.0
    %852 = vmatprep.subr.mxu0 0.0
    %853 = vmatpush2.msra.mxu0 0.0
    %854 = vmatprep.subr.mxu0 0.0
    %855 = vmatpush2.msra.mxu0 0.0
    %856 = vmatprep.subr.mxu0 0.0
    %857 = vmatpush2.msra.mxu0 0.0
    %858 = vmatprep.subr.mxu0 0.0
    %859 = vmatpush2.msra.mxu0 0.0
    %860 = vmatprep.subr.mxu0 0.0
    %861 = vmatpush2.msra.mxu0 0.0
    %862 = vmatprep.subr.mxu0 0.0
    %863 = vmatpush2.msra.mxu0 0.0
    %864 = vmatprep.subr.mxu0 0.0
    %865 = vmatpush2.msra.mxu0 0.0
    %866 = vmatprep.subr.mxu0 0.0
    %867 = vmatpush2.msra.mxu0 0.0
    %868 = vmatprep.subr.mxu0 0.0
    %869 = vmatpush2.msra.mxu0 0.0
    %870 = vmatprep.subr.mxu0 0.0
    %871 = vmatpush2.msra.mxu0 0.0
    %872 = vmatprep.subr.mxu0 0.0
    %873 = vmatpush2.msra.mxu0 0.0
    %874 = vmatprep.subr.mxu0 0.0
    %875 = vmatpush2.msra.mxu0 0.0
    %876 = vmatprep.subr.mxu0 0.0
    %877 = vmatpush2.msra.mxu0 0.0
    %878 = vmatprep.subr.mxu0 0.0
    %879 = vmatpush2.msra.mxu0 0.0
    %880 = vmatprep.subr.mxu0 0.0
    %881 = vmatpush2.msra.mxu0 0.0
    %882 = vmatprep.mubr.f32.mxu0 0.0
    %883 = vmatmul.mubr.f32.gmra.mxu0 %v467
    %v884 = vpop.f32.mrf.mxu0
    %v885 = vadd.f32 0.0, %v884
    %v886 = vpop.f32.mrf.mxu0
    %887 = vmatprep.mubr.f32.mxu0 0.0
    %888 = vmatmul.mubr.f32.gmra.mxu0 %v470
    %v889 = vpop.f32.mrf.mxu0
    %v890 = vadd.f32 0.0, %v889
    %v891 = vpop.f32.mrf.mxu0
    %892 = vmatprep.mubr.f32.mxu0 0.0
    %893 = vmatmul.mubr.f32.gmra.mxu0 %v473
    %v894 = vpop.f32.mrf.mxu0
    %v895 = vadd.f32 0.0, %v894
    %v896 = vpop.f32.mrf.mxu0
    %897 = vmatprep.mubr.f32.mxu0 0.0
    %898 = vmatmul.mubr.f32.gmra.mxu0 %v476
    %v899 = vpop.f32.mrf.mxu0
    %v900 = vadd.f32 0.0, %v899
    %v901 = vpop.f32.mrf.mxu0
    %902 = vdwg.mxu0
    %v903 = vmul.f32 %v545, %v545
    %v904 = vmul.f32 %v550, %v550
    %v905 = vmul.f32 %v555, %v555
    %v906 = vmul.f32 %v560, %v560
    %v907 = vmul.f32 %v630, %v630
    %v908 = vmul.f32 %v635, %v635
    %v909 = vmul.f32 %v640, %v640
    %v910 = vmul.f32 %v645, %v645
    %v911 = vmul.f32 %v545, %v630
    %v912 = vmul.f32 %v550, %v635
    %v913 = vmul.f32 %v555, %v640
    %v914 = vmul.f32 %v560, %v645
    %v915 = vsub.f32 %v715, %v903
    %v916 = vsub.f32 %v720, %v904
    %v917 = vsub.f32 %v725, %v905
    %v918 = vsub.f32 %v730, %v906
    %v919 = vsub.f32 %v800, %v907
    %v920 = vsub.f32 %v805, %v908
    %v921 = vsub.f32 %v810, %v909
    %v922 = vsub.f32 %v815, %v910
    %v923 = vsub.f32 %v885, %v911
    %v924 = vsub.f32 %v890, %v912
    %v925 = vsub.f32 %v895, %v913
    %v926 = vsub.f32 %v900, %v914
    %v927 = vmul.f32 %v911, 2.0
    %v928 = vmul.f32 %v912, 2.0
    %v929 = vmul.f32 %v913, 2.0
    %v930 = vmul.f32 %v914, 2.0
    %v931 = vstv %s25
    %v932 = vadd.f32 %v927, %v931
    %v933 = vadd.f32 %v928, %v931
    %v934 = vadd.f32 %v929, %v931
    %v935 = vadd.f32 %v930, %v931
    %v936 = vmul.f32 %v923, 2.0
    %v937 = vmul.f32 %v924, 2.0
    %v938 = vmul.f32 %v925, 2.0
    %v939 = vmul.f32 %v926, 2.0
    %v940 = vstv %s26
    %v941 = vadd.f32 %v936, %v940
    %v942 = vadd.f32 %v937, %v940
    %v943 = vadd.f32 %v938, %v940
    %v944 = vadd.f32 %v939, %v940
    %v945 = vmul.f32 %v932, %v941
    %v946 = vmul.f32 %v933, %v942
    %v947 = vmul.f32 %v934, %v943
    %v948 = vmul.f32 %v935, %v944
    %v949 = vadd.f32 %v903, %v907
    %v950 = vadd.f32 %v904, %v908
    %v951 = vadd.f32 %v905, %v909
    %v952 = vadd.f32 %v906, %v910
    %v953 = vadd.f32 %v949, %v931
    %v954 = vadd.f32 %v950, %v931
    %v955 = vadd.f32 %v951, %v931
    %v956 = vadd.f32 %v952, %v931
    %v957 = vadd.f32 %v915, %v919
    %v958 = vadd.f32 %v916, %v920
    %v959 = vadd.f32 %v917, %v921
    %v960 = vadd.f32 %v918, %v922
    %v961 = vadd.f32 %v957, %v940
    %v962 = vadd.f32 %v958, %v940
    %v963 = vadd.f32 %v959, %v940
    %v964 = vadd.f32 %v960, %v940
    %v965 = vmul.f32 %v953, %v961
    %v966 = vmul.f32 %v954, %v962
    %v967 = vmul.f32 %v955, %v963
    %v968 = vmul.f32 %v956, %v964
    %v969 = vrcp.pop %v965
    %v970 = vmul.f32 %v945, %v969
    %v971 = vrcp.pop %v966
    %v972 = vmul.f32 %v946, %v971
    %v973 = vrcp.pop %v967
    %v974 = vmul.f32 %v947, %v973
    %v975 = vrcp.pop %v968
    %v976 = vmul.f32 %v948, %v975
    %vm977 = vcmp.ne.f32.partialorder %v970, %v970
    %vm978 = vcmp.ne.f32.partialorder %v972, %v972
    %vm979 = vcmp.ne.f32.partialorder %v974, %v974
    %vm980 = vcmp.ne.f32.partialorder %v976, %v976
    %v981 = vmax.f32 %v970, -3.4028235e+38
    %v982 = vmax.f32 %v972, -3.4028235e+38
    %v983 = vmax.f32 %v974, -3.4028235e+38
    %v984 = vmax.f32 %v976, -3.4028235e+38
    %v985 = vmin.f32 %v981, 3.4028235e+38
    %v986 = vmin.f32 %v982, 3.4028235e+38
    %v987 = vmin.f32 %v983, 3.4028235e+38
    %v988 = vmin.f32 %v984, 3.4028235e+38
    %v989 = vsel %vm977, 1.0, %v985
    %v990 = vsel %vm978, 1.0, %v986
    %v991 = vsel %vm979, 1.0, %v987
    %v992 = vsel %vm980, 1.0, %v988
    %vm993 = vcmask 130048
    %v994 = vsel %vm993, %v989, 0.0
    %v995 = vsel %vm993, %v990, 0.0
    %v996 = vadd.f32 %v994, %v995
    %v997 = vsel %vm993, %v991, 0.0
    %v998 = vadd.f32 %v996, %v997
    %v999 = vsel %vm993, %v992, 0.0
    %v1000 = vadd.f32 %v998, %v999
    %1001 = vadd.xlane.f32.xlu0 %v1000
    %v1002 = vpop.xlane.xlu0 %1001
    %v1003 = vrot.slane %v1002, 4
    %v1004 = vadd.f32 %v1002, %v1003
    %v1005 = vrot.slane %v1004, 2
    %v1006 = vadd.f32 %v1004, %v1005
    %v1007 = vrot.slane %v1006, 1
    %v1008 = vadd.f32 %v1006, %v1007
    %s1009 = vtos %v1008
    %v1010 = vstv %s1009
    %1011 = vst [vmem:[#allocation3] sm:$0x1] %v1010
    // Predicated region
    $region22: #{tpu_custom_call.1} parent=1 // pred_check
      _
    $region23: #{tpu_custom_call.1} parent=1 // pred_check_branch
      %1013 = sbr.rel (0) target = $region25
    $region24: #{tpu_custom_call.1} parent=1 // pred_region
      %s1015 = ssub.s32 16, 16
      %1016 = vsyncadd [#allocation4], %s1015
      %s1018 = sshll.u32 [#allocation3], 4
      %s1019 = int_to_ptr.vmem [resolvable:$true] %s1018
      %1021 = dma.vmem_to_hbm [thread:$0]  %s1019, 16, %s5, [#allocation4]
    $region25: #{tpu_custom_call.1} parent=1 // pred_fallthru
      _
    // Predicated region
    $region26: #{tpu_custom_call.1} parent=1 // pred_check
      _
    $region27: #{tpu_custom_call.1} parent=1 // pred_check_branch
      %1023 = sbr.rel (0) target = $region29
    $region28: #{tpu_custom_call.1} parent=1 // pred_region
      %1024 = dma.done [#allocation4], 16
    $region29: #{tpu_custom_call.1} parent=1 // pred_fallthru
      _
    %1025 = vsyncpa [#allocation4], 1

</llo_original>
